<compile_context>
chip_gen: v5e
topology: v5e:2x2
jax: 0.10.0
libtpu: 0.0.40
codegen_flags: <defaults>
</compile_context>

<pallas_src>
import jax
import jax.numpy as jnp
from jax.experimental import pallas as pl
from jax.experimental.pallas import tpu as pltpu


def _round_up(x, m):
    return (x + m - 1) // m * m


def _pad_to(a, axis, new_size):
    pad = new_size - a.shape[axis]
    if pad <= 0:
        return a
    widths = [(0, 0)] * a.ndim
    widths[axis] = (0, pad)
    return jnp.pad(a, widths)


def _fused_heads_kernel(x_ref,
                        w1a_ref, b1a_ref, w2a_ref, b2a_ref,
                        w1b_ref, b1b_ref, w2b_ref, b2b_ref,
                        o1_ref, o2_ref):
    """x_ref: (2, tb, Hp) -- token-0 / token-1 rows for this batch tile.

    Head 1: token 0 -> dense -> tanh -> out_proj            -> o1
    Head 2: token 1 -> dense -> tanh -> out_proj -> sigmoid -> o2
    """
    # TODO(synk): training-mode dropout (pltpu.prng_*) not implemented; the
    #             PyTorch module's dropout layers are identities in eval mode.
    f32 = jnp.float32
    cdt = w1a_ref.dtype  # compute dtype follows the weights (bf16-capable MXU)

    def head(x, w1_ref, b1_ref, w2_ref, b2_ref):
        h = jnp.dot(x, w1_ref[...], preferred_element_type=f32)
        h = jnp.tanh(h + b1_ref[...].astype(f32))
        y = jnp.dot(h.astype(cdt), w2_ref[...], preferred_element_type=f32)
        return y + b2_ref[...].astype(f32)

    y1 = head(x_ref[0].astype(cdt), w1a_ref, b1a_ref, w2a_ref, b2a_ref)
    o1_ref[...] = y1.astype(o1_ref.dtype)

    y2 = head(x_ref[1].astype(cdt), w1b_ref, b1b_ref, w2b_ref, b2b_ref)
    # sigmoid(y) == 0.5 * (tanh(y/2) + 1): exact, single EUP transcendental,
    # no VALU divide (cheaper than 1/(1+exp(-y))).
    y2 = 0.5 * (jnp.tanh(0.5 * y2) + 1.0)
    o2_ref[...] = y2.astype(o2_ref.dtype)


def _prep_head(w1, b1, w2, b2, *, hp, dp, cdtype):
    """Zero-pad one head's parameters to lane-dense (128-multiple) shapes."""
    nc = w2.shape[1]
    ncp = _round_up(nc, 128)
    w1p = _pad_to(_pad_to(w1.astype(cdtype), 0, hp), 1, dp)
    b1p = _pad_to(b1.reshape(1, -1).astype(cdtype), 1, dp)
    w2p = _pad_to(_pad_to(w2.astype(cdtype), 0, dp), 1, ncp)
    b2p = _pad_to(b2.reshape(1, -1).astype(cdtype), 1, ncp)
    return (w1p, b1p, w2p, b2p), nc, ncp


def ernie_encode_heads(sequence_output, head1_params, head2_params, *,
                       max_block_b=512):
    """ErnieEncode forward downstream of the ERNIE backbone.

    sequence_output: [B, S, H] (== outputs[0] of the backbone, S >= 2).
    head*_params: (w1 [H, D], b1 [D] or [1, D], w2 [D, nc], b2 [nc] or [1, nc]).
    Returns (logits1 [B, nc1], sigmoid(logits2) [B, nc2]).
    """
    # TODO(synk): the ERNIE transformer backbone (self.ernie) is an external
    #             pretrained module and is not translated here.
    B, S, H = sequence_output.shape
    assert S >= 2, "ErnieEncode needs at least the first two token positions"
    out_dtype = sequence_output.dtype

    w1a = head1_params[0]
    cdtype = w1a.dtype
    D = w1a.shape[1]
    hp = _round_up(H, 128)   # lane-dense K for the first matmul
    dp = _round_up(D, 128)   # lane-dense inner dim

    pa, nc1, nc1p = _prep_head(*head1_params, hp=hp, dp=dp, cdtype=cdtype)
    pb, nc2, nc2p = _prep_head(*head2_params, hp=hp, dp=dp, cdtype=cdtype)

    in_b = jnp.dtype(cdtype).itemsize
    x_b = jnp.dtype(sequence_output.dtype).itemsize
    out_b = jnp.dtype(out_dtype).itemsize
    # Both heads' parameters (single-buffered, constant index_map).
    w_bytes = (2 * (hp * dp + dp) + dp * (nc1p + nc2p) + nc1p + nc2p) * in_b

    def vmem_need(tb, weights_buffered):
        x_tile = 2 * tb * hp * x_b                 # (2, tb, Hp) input tile
        out_tile = tb * (nc1p + nc2p) * out_b
        inter = tb * (2 * dp + nc1p + nc2p) * 4    # f32 intermediates
        wb = w_bytes if weights_buffered else 2 * w_bytes
        return 2 * x_tile + 2 * out_tile + wb + inter + (2 << 20)

    # Per-generation VMEM budget (v7x: 64 MiB/TC, v5e/v6e: 128 MiB).
    try:
        vmem_cap = int(pltpu.get_tpu_info().vmem_capacity_bytes)
    except Exception:
        vmem_cap = 64 << 20
    budget = max(vmem_cap - (4 << 20), 16 << 20)

    # Batch tile: multiple of 8 sublanes, capped at max_block_b, and split into
    # >= 2 grid steps when possible so the "parallel" axis spans both v7x TCs.
    b8 = _round_up(max(B, 1), 8)
    if b8 <= 8:
        tb = 8
    else:
        tb = min(max_block_b, _round_up((b8 + 1) // 2, 8))
    while tb > 8 and vmem_need(tb, True) > budget:
        tb = _round_up(tb // 2, 8)
    # TODO(synk): if the weights alone overflow VMEM (very large hidden sizes),
    #             a K-reduction grid axis over input_dim/inner_dim would be
    #             needed; not implemented for these pooler-head sizes.
    b_pad = _round_up(B, tb)
    grid = (b_pad // tb,)

    # Tiny [2, B, H] slab with only the two pooled token rows; the cast to the
    # weight dtype happens inside the kernel (no full-tensor passes over HBM).
    x2 = jnp.swapaxes(sequence_output[:, :2, :], 0, 1)
    if b_pad != B or hp != H:
        x2 = jnp.pad(x2, ((0, 0), (0, b_pad - B), (0, hp - H)))

    cost = pl.CostEstimate(
        flops=2 * b_pad * (2 * hp * dp + dp * (nc1p + nc2p)),
        transcendentals=b_pad * (2 * dp + nc2p),
        bytes_accessed=(2 * b_pad * hp * x_b + w_bytes
                        + b_pad * (nc1p + nc2p) * out_b),
    )

    def run(weights_buffered):
        wmode = ({"pipeline_mode": pl.Buffered(1)} if weights_buffered else {})
        const2 = lambda i: (0, 0)
        in_specs = [
            pl.BlockSpec((2, tb, hp), lambda i: (0, i, 0)),
            pl.BlockSpec((hp, dp), const2, **wmode),
            pl.BlockSpec((1, dp), const2, **wmode),
            pl.BlockSpec((dp, nc1p), const2, **wmode),
            pl.BlockSpec((1, nc1p), const2, **wmode),
            pl.BlockSpec((hp, dp), const2, **wmode),
            pl.BlockSpec((1, dp), const2, **wmode),
            pl.BlockSpec((dp, nc2p), const2, **wmode),
            pl.BlockSpec((1, nc2p), const2, **wmode),
        ]
        out_specs = (
            pl.BlockSpec((tb, nc1p), lambda i: (i, 0)),
            pl.BlockSpec((tb, nc2p), lambda i: (i, 0)),
        )
        vmem_limit = int(min(max(vmem_need(tb, weights_buffered), 16 << 20),
                             budget))
        out = pl.pallas_call(
            _fused_heads_kernel,
            out_shape=(jax.ShapeDtypeStruct((b_pad, nc1p), out_dtype),
                       jax.ShapeDtypeStruct((b_pad, nc2p), out_dtype)),
            grid=grid,
            in_specs=in_specs,
            out_specs=out_specs,
            compiler_params=pltpu.CompilerParams(
                dimension_semantics=("parallel",),
                vmem_limit_bytes=vmem_limit,
            ),
            cost_estimate=cost,
        )(x2, *pa, *pb)
        return jax.block_until_ready(out)

    try:
        o1, o2 = run(True)
    except Exception:
        # Fallback for jax versions without BlockSpec(pipeline_mode=...).
        o1, o2 = run(False)

    return o1[:B, :nc1], o2[:B, :nc2]


def init_head_params(key, input_dim, inner_dim, num_classes, dtype=jnp.float32):
    """Deterministic synthetic parameters (uniform, like nn.Linear defaults),
    stored as [in_features, out_features] (transposed vs. PyTorch)."""
    k1, k2, k3, k4 = jax.random.split(key, 4)
    lim1 = 1.0 / (input_dim ** 0.5)
    lim2 = 1.0 / (inner_dim ** 0.5)
    w1 = jax.random.uniform(k1, (input_dim, inner_dim), dtype, -lim1, lim1)
    b1 = jax.random.uniform(k2, (1, inner_dim), dtype, -lim1, lim1)
    w2 = jax.random.uniform(k3, (inner_dim, num_classes), dtype, -lim2, lim2)
    b2 = jax.random.uniform(k4, (1, num_classes), dtype, -lim2, lim2)
    return w1, b1, w2, b2


def _head_ref(x, w1, b1, w2, b2, apply_sigmoid=False):
    f32 = jnp.float32
    h = jnp.tanh(x.astype(f32) @ w1.astype(f32) + b1.reshape(1, -1).astype(f32))
    y = h @ w2.astype(f32) + b2.reshape(1, -1).astype(f32)
    return jax.nn.sigmoid(y) if apply_sigmoid else y


if __name__ == "__main__":
    # Small shapes consistent with the module: hidden_size=32, two heads.
    B, S, H = 8, 8, 32
    num_classes1, num_classes2 = 8, 4

    key = jax.random.PRNGKey(0)
    kx, k1, k2 = jax.random.split(key, 3)
    seq_out = jax.random.normal(kx, (B, S, H), jnp.float32)
    p1 = init_head_params(k1, H, H, num_classes1)
    p2 = init_head_params(k2, H, H, num_classes2)

    logits1, probs2 = ernie_encode_heads(seq_out, p1, p2)
    logits1, probs2 = jax.block_until_ready((logits1, probs2))

    ref1 = _head_ref(seq_out[:, 0, :], *p1)
    ref2 = _head_ref(seq_out[:, 1, :], *p2, apply_sigmoid=True)
    assert logits1.shape == (B, num_classes1)
    assert probs2.shape == (B, num_classes2)
    assert jnp.allclose(logits1, ref1, atol=1e-5, rtol=1e-5)
    assert jnp.allclose(probs2, ref2, atol=1e-5, rtol=1e-5)

    # bf16 parameter path (f32 accumulation in-kernel): loose check.  The tanh
    # intermediate is cast to bf16 before the second dot, so this differs
    # slightly from the f32 reference (documented, covered by the tolerance).
    p1_bf = tuple(p.astype(jnp.bfloat16) for p in p1)
    p2_bf = tuple(p.astype(jnp.bfloat16) for p in p2)
    l1b, p2b = ernie_encode_heads(seq_out, p1_bf, p2_bf)
    l1b, p2b = jax.block_until_ready((l1b, p2b))
    ref1b = _head_ref(seq_out[:, 0, :], *p1_bf)
    ref2b = _head_ref(seq_out[:, 1, :], *p2_bf, apply_sigmoid=True)
    assert jnp.allclose(l1b, ref1b, atol=5e-2, rtol=5e-2)
    assert jnp.allclose(p2b, ref2b, atol=5e-2, rtol=5e-2)

    print("KERNEL_OK")
</pallas_src>

<mosaic_0001>
module attributes {stable_mosaic.version = 11 : i64} {
  func.func @_fused_heads_kernel(%arg0: i32, %arg1: memref<2x8x128xf32, #tpu.memory_space<vmem>>, %arg2: memref<128x128xf32, #tpu.memory_space<vmem>>, %arg3: memref<1x128xf32, #tpu.memory_space<vmem>>, %arg4: memref<128x128xf32, #tpu.memory_space<vmem>>, %arg5: memref<1x128xf32, #tpu.memory_space<vmem>>, %arg6: memref<128x128xf32, #tpu.memory_space<vmem>>, %arg7: memref<1x128xf32, #tpu.memory_space<vmem>>, %arg8: memref<128x128xf32, #tpu.memory_space<vmem>>, %arg9: memref<1x128xf32, #tpu.memory_space<vmem>>, %arg10: memref<8x128xf32, #tpu.memory_space<vmem>>, %arg11: memref<8x128xf32, #tpu.memory_space<vmem>>) attributes {dimension_semantics = [#tpu.dimension_semantics<parallel>], iteration_bounds = array<i64: 1>, scalar_prefetch = 0 : i64, scratch_operands = 0 : i64, tpu.core_type = #tpu.core_type<tc>, window_params = [{transform_indices = @transform_0, window_bounds = array<i64: 2, 8, 128>}, {pipeline_mode = #tpu.pipeline_mode<synchronous>, transform_indices = @transform_1, window_bounds = array<i64: 128, 128>}, {pipeline_mode = #tpu.pipeline_mode<synchronous>, transform_indices = @transform_2, window_bounds = array<i64: 1, 128>}, {pipeline_mode = #tpu.pipeline_mode<synchronous>, transform_indices = @transform_3, window_bounds = array<i64: 128, 128>}, {pipeline_mode = #tpu.pipeline_mode<synchronous>, transform_indices = @transform_4, window_bounds = array<i64: 1, 128>}, {pipeline_mode = #tpu.pipeline_mode<synchronous>, transform_indices = @transform_5, window_bounds = array<i64: 128, 128>}, {pipeline_mode = #tpu.pipeline_mode<synchronous>, transform_indices = @transform_6, window_bounds = array<i64: 1, 128>}, {pipeline_mode = #tpu.pipeline_mode<synchronous>, transform_indices = @transform_7, window_bounds = array<i64: 128, 128>}, {pipeline_mode = #tpu.pipeline_mode<synchronous>, transform_indices = @transform_8, window_bounds = array<i64: 1, 128>}, {transform_indices = @transform_9, window_bounds = array<i64: 8, 128>}, {transform_indices = @transform_10, window_bounds = array<i64: 8, 128>}]} {
    %c0 = arith.constant 0 : index
    %c0_0 = arith.constant 0 : index
    %c0_1 = arith.constant 0 : index
    %0 = vector.load %arg1[%c0, %c0_0, %c0_1] : memref<2x8x128xf32, #tpu.memory_space<vmem>>, vector<1x8x128xf32>
    %1 = vector.shape_cast %0 : vector<1x8x128xf32> to vector<8x128xf32>
    %c0_2 = arith.constant 0 : index
    %c0_3 = arith.constant 0 : index
    %2 = vector.load %arg2[%c0_2, %c0_3] : memref<128x128xf32, #tpu.memory_space<vmem>>, vector<128x128xf32>
    %cst = arith.constant dense<0.000000e+00> : vector<8x128xf32>
    %3 = tpu.matmul %1, %2, %cst {dimension_numbers = #tpu.dot_dimension_numbers<[1], [0], [0], [1], [0, 0, 1, 1], [], []>} : vector<8x128xf32>, vector<128x128xf32>, vector<8x128xf32> -> vector<8x128xf32>
    %c0_4 = arith.constant 0 : index
    %c0_5 = arith.constant 0 : index
    %4 = vector.load %arg3[%c0_4, %c0_5] : memref<1x128xf32, #tpu.memory_space<vmem>>, vector<1x128xf32>
    %5 = vector.broadcast %4 : vector<1x128xf32> to vector<8x128xf32>
    %6 = arith.addf %3, %5 : vector<8x128xf32>
    %7 = math.tanh %6 : vector<8x128xf32>
    %c0_6 = arith.constant 0 : index
    %c0_7 = arith.constant 0 : index
    %8 = vector.load %arg4[%c0_6, %c0_7] : memref<128x128xf32, #tpu.memory_space<vmem>>, vector<128x128xf32>
    %cst_8 = arith.constant dense<0.000000e+00> : vector<8x128xf32>
    %9 = tpu.matmul %7, %8, %cst_8 {dimension_numbers = #tpu.dot_dimension_numbers<[1], [0], [0], [1], [0, 0, 1, 1], [], []>} : vector<8x128xf32>, vector<128x128xf32>, vector<8x128xf32> -> vector<8x128xf32>
    %c0_9 = arith.constant 0 : index
    %c0_10 = arith.constant 0 : index
    %10 = vector.load %arg5[%c0_9, %c0_10] : memref<1x128xf32, #tpu.memory_space<vmem>>, vector<1x128xf32>
    %11 = vector.broadcast %10 : vector<1x128xf32> to vector<8x128xf32>
    %12 = arith.addf %9, %11 : vector<8x128xf32>
    %c0_11 = arith.constant 0 : index
    %c0_12 = arith.constant 0 : index
    %13 = vector.load %arg10[%c0_11, %c0_12] : memref<8x128xf32, #tpu.memory_space<vmem>>, vector<8x128xf32>
    tpu.vector_store %arg10[%c0_11, %c0_12], %12 {strides = array<i32>} : memref<8x128xf32, #tpu.memory_space<vmem>>, vector<8x128xf32>,
    %c1 = arith.constant 1 : index
    %c0_13 = arith.constant 0 : index
    %c0_14 = arith.constant 0 : index
    %14 = vector.load %arg1[%c1, %c0_13, %c0_14] : memref<2x8x128xf32, #tpu.memory_space<vmem>>, vector<1x8x128xf32>
    %15 = vector.shape_cast %14 : vector<1x8x128xf32> to vector<8x128xf32>
    %c0_15 = arith.constant 0 : index
    %c0_16 = arith.constant 0 : index
    %16 = vector.load %arg6[%c0_15, %c0_16] : memref<128x128xf32, #tpu.memory_space<vmem>>, vector<128x128xf32>
    %cst_17 = arith.constant dense<0.000000e+00> : vector<8x128xf32>
    %17 = tpu.matmul %15, %16, %cst_17 {dimension_numbers = #tpu.dot_dimension_numbers<[1], [0], [0], [1], [0, 0, 1, 1], [], []>} : vector<8x128xf32>, vector<128x128xf32>, vector<8x128xf32> -> vector<8x128xf32>
    %c0_18 = arith.constant 0 : index
    %c0_19 = arith.constant 0 : index
    %18 = vector.load %arg7[%c0_18, %c0_19] : memref<1x128xf32, #tpu.memory_space<vmem>>, vector<1x128xf32>
    %19 = vector.broadcast %18 : vector<1x128xf32> to vector<8x128xf32>
    %20 = arith.addf %17, %19 : vector<8x128xf32>
    %21 = math.tanh %20 : vector<8x128xf32>
    %c0_20 = arith.constant 0 : index
    %c0_21 = arith.constant 0 : index
    %22 = vector.load %arg8[%c0_20, %c0_21] : memref<128x128xf32, #tpu.memory_space<vmem>>, vector<128x128xf32>
    %cst_22 = arith.constant dense<0.000000e+00> : vector<8x128xf32>
    %23 = tpu.matmul %21, %22, %cst_22 {dimension_numbers = #tpu.dot_dimension_numbers<[1], [0], [0], [1], [0, 0, 1, 1], [], []>} : vector<8x128xf32>, vector<128x128xf32>, vector<8x128xf32> -> vector<8x128xf32>
    %c0_23 = arith.constant 0 : index
    %c0_24 = arith.constant 0 : index
    %24 = vector.load %arg9[%c0_23, %c0_24] : memref<1x128xf32, #tpu.memory_space<vmem>>, vector<1x128xf32>
    %25 = vector.broadcast %24 : vector<1x128xf32> to vector<8x128xf32>
    %26 = arith.addf %23, %25 : vector<8x128xf32>
    %cst_25 = arith.constant 5.000000e-01 : f32
    %27 = vector.broadcast %cst_25 : f32 to vector<8x128xf32>
    %28 = arith.mulf %27, %26 : vector<8x128xf32>
    %29 = math.tanh %28 : vector<8x128xf32>
    %cst_26 = arith.constant 1.000000e+00 : f32
    %30 = vector.broadcast %cst_26 : f32 to vector<8x128xf32>
    %31 = arith.addf %29, %30 : vector<8x128xf32>
    %cst_27 = arith.constant 5.000000e-01 : f32
    %32 = vector.broadcast %cst_27 : f32 to vector<8x128xf32>
    %33 = arith.mulf %32, %31 : vector<8x128xf32>
    %c0_28 = arith.constant 0 : index
    %c0_29 = arith.constant 0 : index
    %34 = vector.load %arg11[%c0_28, %c0_29] : memref<8x128xf32, #tpu.memory_space<vmem>>, vector<8x128xf32>
    tpu.vector_store %arg11[%c0_28, %c0_29], %33 {strides = array<i32>} : memref<8x128xf32, #tpu.memory_space<vmem>>, vector<8x128xf32>,
    return
  }
  func.func @transform_0(%arg0: i32) -> (i32, i32, i32) {
    %c0_i32 = arith.constant 0 : i32
    %c0_i32_0 = arith.constant 0 : i32
    %c0_i32_1 = arith.constant 0 : i32
    return %c0_i32, %arg0, %c0_i32_0 : i32, i32, i32
  }
  func.func @transform_1(%arg0: i32) -> (i32, i32) {
    %c0_i32 = arith.constant 0 : i32
    %c0_i32_0 = arith.constant 0 : i32
    %c0_i32_1 = arith.constant 0 : i32
    return %c0_i32, %c0_i32_0 : i32, i32
  }
  func.func @transform_2(%arg0: i32) -> (i32, i32) {
    %c0_i32 = arith.constant 0 : i32
    %c0_i32_0 = arith.constant 0 : i32
    %c0_i32_1 = arith.constant 0 : i32
    return %c0_i32, %c0_i32_0 : i32, i32
  }
  func.func @transform_3(%arg0: i32) -> (i32, i32) {
    %c0_i32 = arith.constant 0 : i32
    %c0_i32_0 = arith.constant 0 : i32
    %c0_i32_1 = arith.constant 0 : i32
    return %c0_i32, %c0_i32_0 : i32, i32
  }
  func.func @transform_4(%arg0: i32) -> (i32, i32) {
    %c0_i32 = arith.constant 0 : i32
    %c0_i32_0 = arith.constant 0 : i32
    %c0_i32_1 = arith.constant 0 : i32
    return %c0_i32, %c0_i32_0 : i32, i32
  }
  func.func @transform_5(%arg0: i32) -> (i32, i32) {
    %c0_i32 = arith.constant 0 : i32
    %c0_i32_0 = arith.constant 0 : i32
    %c0_i32_1 = arith.constant 0 : i32
    return %c0_i32, %c0_i32_0 : i32, i32
  }
  func.func @transform_6(%arg0: i32) -> (i32, i32) {
    %c0_i32 = arith.constant 0 : i32
    %c0_i32_0 = arith.constant 0 : i32
    %c0_i32_1 = arith.constant 0 : i32
    return %c0_i32, %c0_i32_0 : i32, i32
  }
  func.func @transform_7(%arg0: i32) -> (i32, i32) {
    %c0_i32 = arith.constant 0 : i32
    %c0_i32_0 = arith.constant 0 : i32
    %c0_i32_1 = arith.constant 0 : i32
    return %c0_i32, %c0_i32_0 : i32, i32
  }
  func.func @transform_8(%arg0: i32) -> (i32, i32) {
    %c0_i32 = arith.constant 0 : i32
    %c0_i32_0 = arith.constant 0 : i32
    %c0_i32_1 = arith.constant 0 : i32
    return %c0_i32, %c0_i32_0 : i32, i32
  }
  func.func @transform_9(%arg0: i32) -> (i32, i32) {
    %c0_i32 = arith.constant 0 : i32
    %c0_i32_0 = arith.constant 0 : i32
    return %arg0, %c0_i32 : i32, i32
  }
  func.func @transform_10(%arg0: i32) -> (i32, i32) {
    %c0_i32 = arith.constant 0 : i32
    %c0_i32_0 = arith.constant 0 : i32
    return %arg0, %c0_i32 : i32, i32
  }
}

module attributes {stable_mosaic.version = 11 : i64} {
  func.func @_fused_heads_kernel(%arg0: i32, %arg1: memref<2x8x128xf32, #tpu.memory_space<vmem>>, %arg2: memref<128x128xf32, #tpu.memory_space<vmem>>, %arg3: memref<1x128xf32, #tpu.memory_space<vmem>>, %arg4: memref<128x128xf32, #tpu.memory_space<vmem>>, %arg5: memref<1x128xf32, #tpu.memory_space<vmem>>, %arg6: memref<128x128xf32, #tpu.memory_space<vmem>>, %arg7: memref<1x128xf32, #tpu.memory_space<vmem>>, %arg8: memref<128x128xf32, #tpu.memory_space<vmem>>, %arg9: memref<1x128xf32, #tpu.memory_space<vmem>>, %arg10: memref<8x128xf32, #tpu.memory_space<vmem>>, %arg11: memref<8x128xf32, #tpu.memory_space<vmem>>) attributes {dimension_semantics = [#tpu.dimension_semantics<parallel>], iteration_bounds = array<i64: 1>, scalar_prefetch = 0 : i64, scratch_operands = 0 : i64, tpu.core_type = #tpu.core_type<tc>, window_params = [{transform_indices = @transform_0, window_bounds = array<i64: 2, 8, 128>}, {pipeline_mode = #tpu.pipeline_mode<synchronous>, transform_indices = @transform_1, window_bounds = array<i64: 128, 128>}, {pipeline_mode = #tpu.pipeline_mode<synchronous>, transform_indices = @transform_2, window_bounds = array<i64: 1, 128>}, {pipeline_mode = #tpu.pipeline_mode<synchronous>, transform_indices = @transform_3, window_bounds = array<i64: 128, 128>}, {pipeline_mode = #tpu.pipeline_mode<synchronous>, transform_indices = @transform_4, window_bounds = array<i64: 1, 128>}, {pipeline_mode = #tpu.pipeline_mode<synchronous>, transform_indices = @transform_5, window_bounds = array<i64: 128, 128>}, {pipeline_mode = #tpu.pipeline_mode<synchronous>, transform_indices = @transform_6, window_bounds = array<i64: 1, 128>}, {pipeline_mode = #tpu.pipeline_mode<synchronous>, transform_indices = @transform_7, window_bounds = array<i64: 128, 128>}, {pipeline_mode = #tpu.pipeline_mode<synchronous>, transform_indices = @transform_8, window_bounds = array<i64: 1, 128>}, {transform_indices = @transform_9, window_bounds = array<i64: 8, 128>}, {transform_indices = @transform_10, window_bounds = array<i64: 8, 128>}]} {
    %c0 = arith.constant 0 : index
    %c0_0 = arith.constant 0 : index
    %c0_1 = arith.constant 0 : index
    %0 = vector.load %arg1[%c0, %c0_0, %c0_1] : memref<2x8x128xf32, #tpu.memory_space<vmem>>, vector<1x8x128xf32>
    %1 = vector.shape_cast %0 : vector<1x8x128xf32> to vector<8x128xf32>
    %c0_2 = arith.constant 0 : index
    %c0_3 = arith.constant 0 : index
    %2 = vector.load %arg2[%c0_2, %c0_3] : memref<128x128xf32, #tpu.memory_space<vmem>>, vector<128x128xf32>
    %cst = arith.constant dense<0.000000e+00> : vector<8x128xf32>
    %3 = tpu.matmul %1, %2, %cst {dimension_numbers = #tpu.dot_dimension_numbers<[1], [0], [0], [1], [0, 0, 1, 1], [], []>} : vector<8x128xf32>, vector<128x128xf32>, vector<8x128xf32> -> vector<8x128xf32>
    %c0_4 = arith.constant 0 : index
    %c0_5 = arith.constant 0 : index
    %4 = vector.load %arg3[%c0_4, %c0_5] : memref<1x128xf32, #tpu.memory_space<vmem>>, vector<1x128xf32>
    %5 = vector.broadcast %4 : vector<1x128xf32> to vector<8x128xf32>
    %6 = arith.addf %3, %5 : vector<8x128xf32>
    %7 = math.tanh %6 : vector<8x128xf32>
    %c0_6 = arith.constant 0 : index
    %c0_7 = arith.constant 0 : index
    %8 = vector.load %arg4[%c0_6, %c0_7] : memref<128x128xf32, #tpu.memory_space<vmem>>, vector<128x128xf32>
    %cst_8 = arith.constant dense<0.000000e+00> : vector<8x128xf32>
    %9 = tpu.matmul %7, %8, %cst_8 {dimension_numbers = #tpu.dot_dimension_numbers<[1], [0], [0], [1], [0, 0, 1, 1], [], []>} : vector<8x128xf32>, vector<128x128xf32>, vector<8x128xf32> -> vector<8x128xf32>
    %c0_9 = arith.constant 0 : index
    %c0_10 = arith.constant 0 : index
    %10 = vector.load %arg5[%c0_9, %c0_10] : memref<1x128xf32, #tpu.memory_space<vmem>>, vector<1x128xf32>
    %11 = vector.broadcast %10 : vector<1x128xf32> to vector<8x128xf32>
    %12 = arith.addf %9, %11 : vector<8x128xf32>
    %c0_11 = arith.constant 0 : index
    %c0_12 = arith.constant 0 : index
    %13 = vector.load %arg10[%c0_11, %c0_12] : memref<8x128xf32, #tpu.memory_space<vmem>>, vector<8x128xf32>
    tpu.vector_store %arg10[%c0_11, %c0_12], %12 {strides = array<i32>} : memref<8x128xf32, #tpu.memory_space<vmem>>, vector<8x128xf32>,
    %c1 = arith.constant 1 : index
    %c0_13 = arith.constant 0 : index
    %c0_14 = arith.constant 0 : index
    %14 = vector.load %arg1[%c1, %c0_13, %c0_14] : memref<2x8x128xf32, #tpu.memory_space<vmem>>, vector<1x8x128xf32>
    %15 = vector.shape_cast %14 : vector<1x8x128xf32> to vector<8x128xf32>
    %c0_15 = arith.constant 0 : index
    %c0_16 = arith.constant 0 : index
    %16 = vector.load %arg6[%c0_15, %c0_16] : memref<128x128xf32, #tpu.memory_space<vmem>>, vector<128x128xf32>
    %cst_17 = arith.constant dense<0.000000e+00> : vector<8x128xf32>
    %17 = tpu.matmul %15, %16, %cst_17 {dimension_numbers = #tpu.dot_dimension_numbers<[1], [0], [0], [1], [0, 0, 1, 1], [], []>} : vector<8x128xf32>, vector<128x128xf32>, vector<8x128xf32> -> vector<8x128xf32>
    %c0_18 = arith.constant 0 : index
    %c0_19 = arith.constant 0 : index
    %18 = vector.load %arg7[%c0_18, %c0_19] : memref<1x128xf32, #tpu.memory_space<vmem>>, vector<1x128xf32>
    %19 = vector.broadcast %18 : vector<1x128xf32> to vector<8x128xf32>
    %20 = arith.addf %17, %19 : vector<8x128xf32>
    %21 = math.tanh %20 : vector<8x128xf32>
    %c0_20 = arith.constant 0 : index
    %c0_21 = arith.constant 0 : index
    %22 = vector.load %arg8[%c0_20, %c0_21] : memref<128x128xf32, #tpu.memory_space<vmem>>, vector<128x128xf32>
    %cst_22 = arith.constant dense<0.000000e+00> : vector<8x128xf32>
    %23 = tpu.matmul %21, %22, %cst_22 {dimension_numbers = #tpu.dot_dimension_numbers<[1], [0], [0], [1], [0, 0, 1, 1], [], []>} : vector<8x128xf32>, vector<128x128xf32>, vector<8x128xf32> -> vector<8x128xf32>
    %c0_23 = arith.constant 0 : index
    %c0_24 = arith.constant 0 : index
    %24 = vector.load %arg9[%c0_23, %c0_24] : memref<1x128xf32, #tpu.memory_space<vmem>>, vector<1x128xf32>
    %25 = vector.broadcast %24 : vector<1x128xf32> to vector<8x128xf32>
    %26 = arith.addf %23, %25 : vector<8x128xf32>
    %cst_25 = arith.constant 5.000000e-01 : f32
    %27 = vector.broadcast %cst_25 : f32 to vector<8x128xf32>
    %28 = arith.mulf %27, %26 : vector<8x128xf32>
    %29 = math.tanh %28 : vector<8x128xf32>
    %cst_26 = arith.constant 1.000000e+00 : f32
    %30 = vector.broadcast %cst_26 : f32 to vector<8x128xf32>
    %31 = arith.addf %29, %30 : vector<8x128xf32>
    %cst_27 = arith.constant 5.000000e-01 : f32
    %32 = vector.broadcast %cst_27 : f32 to vector<8x128xf32>
    %33 = arith.mulf %32, %31 : vector<8x128xf32>
    %c0_28 = arith.constant 0 : index
    %c0_29 = arith.constant 0 : index
    %34 = vector.load %arg11[%c0_28, %c0_29] : memref<8x128xf32, #tpu.memory_space<vmem>>, vector<8x128xf32>
    tpu.vector_store %arg11[%c0_28, %c0_29], %33 {strides = array<i32>} : memref<8x128xf32, #tpu.memory_space<vmem>>, vector<8x128xf32>,
    return
  }
  func.func @transform_0(%arg0: i32) -> (i32, i32, i32) {
    %c0_i32 = arith.constant 0 : i32
    %c0_i32_0 = arith.constant 0 : i32
    %c0_i32_1 = arith.constant 0 : i32
    return %c0_i32, %arg0, %c0_i32_0 : i32, i32, i32
  }
  func.func @transform_1(%arg0: i32) -> (i32, i32) {
    %c0_i32 = arith.constant 0 : i32
    %c0_i32_0 = arith.constant 0 : i32
    %c0_i32_1 = arith.constant 0 : i32
    return %c0_i32, %c0_i32_0 : i32, i32
  }
  func.func @transform_2(%arg0: i32) -> (i32, i32) {
    %c0_i32 = arith.constant 0 : i32
    %c0_i32_0 = arith.constant 0 : i32
    %c0_i32_1 = arith.constant 0 : i32
    return %c0_i32, %c0_i32_0 : i32, i32
  }
  func.func @transform_3(%arg0: i32) -> (i32, i32) {
    %c0_i32 = arith.constant 0 : i32
    %c0_i32_0 = arith.constant 0 : i32
    %c0_i32_1 = arith.constant 0 : i32
    return %c0_i32, %c0_i32_0 : i32, i32
  }
  func.func @transform_4(%arg0: i32) -> (i32, i32) {
    %c0_i32 = arith.constant 0 : i32
    %c0_i32_0 = arith.constant 0 : i32
    %c0_i32_1 = arith.constant 0 : i32
    return %c0_i32, %c0_i32_0 : i32, i32
  }
  func.func @transform_5(%arg0: i32) -> (i32, i32) {
    %c0_i32 = arith.constant 0 : i32
    %c0_i32_0 = arith.constant 0 : i32
    %c0_i32_1 = arith.constant 0 : i32
    return %c0_i32, %c0_i32_0 : i32, i32
  }
  func.func @transform_6(%arg0: i32) -> (i32, i32) {
    %c0_i32 = arith.constant 0 : i32
    %c0_i32_0 = arith.constant 0 : i32
    %c0_i32_1 = arith.constant 0 : i32
    return %c0_i32, %c0_i32_0 : i32, i32
  }
  func.func @transform_7(%arg0: i32) -> (i32, i32) {
    %c0_i32 = arith.constant 0 : i32
    %c0_i32_0 = arith.constant 0 : i32
    %c0_i32_1 = arith.constant 0 : i32
    return %c0_i32, %c0_i32_0 : i32, i32
  }
  func.func @transform_8(%arg0: i32) -> (i32, i32) {
    %c0_i32 = arith.constant 0 : i32
    %c0_i32_0 = arith.constant 0 : i32
    %c0_i32_1 = arith.constant 0 : i32
    return %c0_i32, %c0_i32_0 : i32, i32
  }
  func.func @transform_9(%arg0: i32) -> (i32, i32) {
    %c0_i32 = arith.constant 0 : i32
    %c0_i32_0 = arith.constant 0 : i32
    return %arg0, %c0_i32 : i32, i32
  }
  func.func @transform_10(%arg0: i32) -> (i32, i32) {
    %c0_i32 = arith.constant 0 : i32
    %c0_i32_0 = arith.constant 0 : i32
    return %arg0, %c0_i32 : i32, i32
  }
}

</mosaic_0001>

<llo_original>
// kernel: tpu_custom_call.1
$region0: #{tpu_custom_call.1}
  #allocation0 [shape = 'u32[]', space=smem, size = 0x4, offset = 0x4, fixed_abs, tag = 'smem constant byte address 0x4 - core index']
  #allocation1 [shape = 'u32[72,128]{1,0:T(1,128)}', space=vmem, size = 0x9000, scoped, tag = 'internal scratch']
  %s0 = inlined_call_operand.hbm [shape: f32[2,8,128], index: 0, kind: input, shape index: {}]
  %s1 = inlined_call_operand.hbm [shape: f32[128,128], index: 1, kind: input, shape index: {}]
  %s2 = inlined_call_operand.vmem [shape: f32[1,128], index: 2, kind: input, shape index: {}]
  %s3 = inlined_call_operand.hbm [shape: f32[128,128], index: 3, kind: input, shape index: {}]
  %s4 = inlined_call_operand.vmem [shape: f32[1,128], index: 4, kind: input, shape index: {}]
  %s5 = inlined_call_operand.hbm [shape: f32[128,128], index: 5, kind: input, shape index: {}]
  %s6 = inlined_call_operand.vmem [shape: f32[1,128], index: 6, kind: input, shape index: {}]
  %s7 = inlined_call_operand.hbm [shape: f32[128,128], index: 7, kind: input, shape index: {}]
  %s8 = inlined_call_operand.vmem [shape: f32[1,128], index: 8, kind: input, shape index: {}]
  %s9 = inlined_call_operand.hbm [shape: f32[8,128], index: 9, kind: output, shape index: {0}]
  %s10 = inlined_call_operand.hbm [shape: f32[8,128], index: 10, kind: output, shape index: {1}]
  %11 = xla_tuple %s9, %s10
  %s12 = sld [smem:[#allocation0]]
  $region74: #{tpu_custom_call.1} parent=0
    _
  %s14 = ssub.s32 1, %s12
  %s15 = scalar_select 0, %s14, %s12
  $region1: #{tpu_custom_call.1} parent=0
    #allocation2 [shape = 'u8[8192]{0}', space=vmem, size = 0x2000, scoped, tag = 'input window, operand 0, single buffered']
    #allocation3 [shape = 's32[1]{0}', space=sflag, size = 0x4, scoped, tag = 'scoped memory for tpu_custom_call.1']
    #allocation4 [shape = 's32[1]{0}', space=sflag, size = 0x4, scoped, tag = 'scoped memory for tpu_custom_call.1']
    #allocation5 [shape = 'u8[65536]{0}', space=vmem, size = 0x10000, scoped, tag = 'input window, operand 1, single buffered']
    #allocation6 [shape = 's32[1]{0}', space=sflag, size = 0x4, scoped, tag = 'scoped memory for tpu_custom_call.1']
    #allocation7 [shape = 'u8[65536]{0}', space=vmem, size = 0x10000, scoped, tag = 'input window, operand 3, single buffered']
    #allocation8 [shape = 'u8[65536]{0}', space=vmem, size = 0x10000, scoped, tag = 'input window, operand 5, single buffered']
    #allocation9 [shape = 's32[1]{0}', space=sflag, size = 0x4, scoped, tag = 'scoped memory for tpu_custom_call.1']
    #allocation10 [shape = 'u8[65536]{0}', space=vmem, size = 0x10000, scoped, tag = 'input window, operand 7, single buffered']
    #allocation11 [shape = 'u8[4096]{0}', space=vmem, size = 0x1000, scoped, tag = 'output window, operand 0, single buffered']
    #allocation12 [shape = 'u8[4096]{0}', space=vmem, size = 0x1000, scoped, tag = 'output window, operand 1, single buffered']
    #allocation13 [shape = 's32[1]{0}', space=sflag, size = 0x4, scoped, tag = 'scoped memory for tpu_custom_call.1']
    %16 = vsyncpa [#allocation3], 0
    %17 = vsyncpa [#allocation6], 0
    %18 = vsyncpa [#allocation9], 0
    %19 = vsyncpa [#allocation4], 0
    %20 = vsyncpa [#allocation13], 0
    // Predicated region
    $region2: #{tpu_custom_call.1} parent=1 // pred_check
      _
    $region3: #{tpu_custom_call.1} parent=1 // pred_check_branch
      %22 = sbr.rel (0) target = $region5
    $region4: #{tpu_custom_call.1} parent=1 // pred_region
      %24 = vsyncadd [#allocation3], 0
      %s25 = sshll.u32 %s0, 4
      %s26 = int_to_ptr.hbm [resolvable:$true] %s25
      %s27 = sshll.u32 [#allocation2], 4
      %s28 = int_to_ptr.vmem [resolvable:$true] %s27
      %33 = dma.hbm_to_vmem [thread:$0]  %s26, 256, %s28, [#allocation3], 128, 128, 8
    $region5: #{tpu_custom_call.1} parent=1 // pred_fallthru
      _
    // Predicated region
    $region6: #{tpu_custom_call.1} parent=1 // pred_check
      _
    $region7: #{tpu_custom_call.1} parent=1 // pred_check_branch
      %35 = sbr.rel (0) target = $region9
    $region8: #{tpu_custom_call.1} parent=1 // pred_region
      %37 = vsyncadd [#allocation6], 0
      %s38 = sshll.u32 %s1, 4
      %s39 = int_to_ptr.hbm [resolvable:$true] %s38
      %s40 = sshll.u32 [#allocation5], 4
      %s41 = int_to_ptr.vmem [resolvable:$true] %s40
      %46 = dma.hbm_to_vmem [thread:$0]  %s39, 2048, %s41, [#allocation6], 128, 128, 8
    $region9: #{tpu_custom_call.1} parent=1 // pred_fallthru
      _
    // Predicated region
    $region10: #{tpu_custom_call.1} parent=1 // pred_check
      _
    $region11: #{tpu_custom_call.1} parent=1 // pred_check_branch
      %48 = sbr.rel (0) target = $region13
    $region12: #{tpu_custom_call.1} parent=1 // pred_region
      _
    $region13: #{tpu_custom_call.1} parent=1 // pred_fallthru
      _
    // Predicated region
    $region14: #{tpu_custom_call.1} parent=1 // pred_check
      _
    $region15: #{tpu_custom_call.1} parent=1 // pred_check_branch
      %50 = sbr.rel (0) target = $region17
    $region16: #{tpu_custom_call.1} parent=1 // pred_region
      %52 = vsyncadd [#allocation6], 0
      %s53 = sshll.u32 %s3, 4
      %s54 = int_to_ptr.hbm [resolvable:$true] %s53
      %s55 = sshll.u32 [#allocation7], 4
      %s56 = int_to_ptr.vmem [resolvable:$true] %s55
      %61 = dma.hbm_to_vmem [thread:$0]  %s54, 2048, %s56, [#allocation6], 128, 128, 8
    $region17: #{tpu_custom_call.1} parent=1 // pred_fallthru
      _
    // Predicated region
    $region18: #{tpu_custom_call.1} parent=1 // pred_check
      _
    $region19: #{tpu_custom_call.1} parent=1 // pred_check_branch
      %63 = sbr.rel (0) target = $region21
    $region20: #{tpu_custom_call.1} parent=1 // pred_region
      _
    $region21: #{tpu_custom_call.1} parent=1 // pred_fallthru
      _
    // Predicated region
    $region22: #{tpu_custom_call.1} parent=1 // pred_check
      _
    $region23: #{tpu_custom_call.1} parent=1 // pred_check_branch
      %65 = sbr.rel (0) target = $region25
    $region24: #{tpu_custom_call.1} parent=1 // pred_region
      %67 = vsyncadd [#allocation9], 0
      %s68 = sshll.u32 %s5, 4
      %s69 = int_to_ptr.hbm [resolvable:$true] %s68
      %s70 = sshll.u32 [#allocation8], 4
      %s71 = int_to_ptr.vmem [resolvable:$true] %s70
      %76 = dma.hbm_to_vmem [thread:$0]  %s69, 2048, %s71, [#allocation9], 128, 128, 8
    $region25: #{tpu_custom_call.1} parent=1 // pred_fallthru
      _
    // Predicated region
    $region26: #{tpu_custom_call.1} parent=1 // pred_check
      _
    $region27: #{tpu_custom_call.1} parent=1 // pred_check_branch
      %78 = sbr.rel (0) target = $region29
    $region28: #{tpu_custom_call.1} parent=1 // pred_region
      _
    $region29: #{tpu_custom_call.1} parent=1 // pred_fallthru
      _
    // Predicated region
    $region30: #{tpu_custom_call.1} parent=1 // pred_check
      _
    $region31: #{tpu_custom_call.1} parent=1 // pred_check_branch
      %80 = sbr.rel (0) target = $region33
    $region32: #{tpu_custom_call.1} parent=1 // pred_region
      %82 = vsyncadd [#allocation9], 0
      %s83 = sshll.u32 %s7, 4
      %s84 = int_to_ptr.hbm [resolvable:$true] %s83
      %s85 = sshll.u32 [#allocation10], 4
      %s86 = int_to_ptr.vmem [resolvable:$true] %s85
      %91 = dma.hbm_to_vmem [thread:$0]  %s84, 2048, %s86, [#allocation9], 128, 128, 8
    $region33: #{tpu_custom_call.1} parent=1 // pred_fallthru
      _
    // Predicated region
    $region34: #{tpu_custom_call.1} parent=1 // pred_check
      _
    $region35: #{tpu_custom_call.1} parent=1 // pred_check_branch
      %93 = sbr.rel (0) target = $region37
    $region36: #{tpu_custom_call.1} parent=1 // pred_region
      _
    $region37: #{tpu_custom_call.1} parent=1 // pred_fallthru
      _
    // Predicated region
    $region38: #{tpu_custom_call.1} parent=1 // pred_check
      _
    $region39: #{tpu_custom_call.1} parent=1 // pred_check_branch
      %95 = sbr.rel (0) target = $region41
    $region40: #{tpu_custom_call.1} parent=1 // pred_region
      %97 = dma.done [#allocation3], 256
    $region41: #{tpu_custom_call.1} parent=1 // pred_fallthru
      _
    // Predicated region
    $region42: #{tpu_custom_call.1} parent=1 // pred_check
      _
    $region43: #{tpu_custom_call.1} parent=1 // pred_check_branch
      %99 = sbr.rel (0) target = $region45
    $region44: #{tpu_custom_call.1} parent=1 // pred_region
      %101 = dma.done [#allocation6], 2048
    $region45: #{tpu_custom_call.1} parent=1 // pred_fallthru
      _
    // Predicated region
    $region46: #{tpu_custom_call.1} parent=1 // pred_check
      _
    $region47: #{tpu_custom_call.1} parent=1 // pred_check_branch
      %103 = sbr.rel (0) target = $region49
    $region48: #{tpu_custom_call.1} parent=1 // pred_region
      %105 = dma.done [#allocation6], 2048
    $region49: #{tpu_custom_call.1} parent=1 // pred_fallthru
      _
    // Predicated region
    $region50: #{tpu_custom_call.1} parent=1 // pred_check
      _
    $region51: #{tpu_custom_call.1} parent=1 // pred_check_branch
      %107 = sbr.rel (0) target = $region53
    $region52: #{tpu_custom_call.1} parent=1 // pred_region
      %109 = dma.done [#allocation9], 2048
    $region53: #{tpu_custom_call.1} parent=1 // pred_fallthru
      _
    // Predicated region
    $region54: #{tpu_custom_call.1} parent=1 // pred_check
      _
    $region55: #{tpu_custom_call.1} parent=1 // pred_check_branch
      %111 = sbr.rel (0) target = $region57
    $region56: #{tpu_custom_call.1} parent=1 // pred_region
      %113 = dma.done [#allocation9], 2048
    $region57: #{tpu_custom_call.1} parent=1 // pred_fallthru
      _
    %v114 = vld [vmem:[#allocation2] sm:$0xff]
    %v115 = vld [vmem:[#allocation5] sm:$0xff]
    %v116 = vld [vmem:[#allocation5 + $0x8] sm:$0xff]
    %v117 = vld [vmem:[#allocation5 + $0x10] sm:$0xff]
    %v118 = vld [vmem:[#allocation5 + $0x18] sm:$0xff]
    %v119 = vld [vmem:[#allocation5 + $0x20] sm:$0xff]
    %v120 = vld [vmem:[#allocation5 + $0x28] sm:$0xff]
    %v121 = vld [vmem:[#allocation5 + $0x30] sm:$0xff]
    %v122 = vld [vmem:[#allocation5 + $0x38] sm:$0xff]
    %v123 = vld [vmem:[#allocation5 + $0x40] sm:$0xff]
    %v124 = vld [vmem:[#allocation5 + $0x48] sm:$0xff]
    %v125 = vld [vmem:[#allocation5 + $0x50] sm:$0xff]
    %v126 = vld [vmem:[#allocation5 + $0x58] sm:$0xff]
    %v127 = vld [vmem:[#allocation5 + $0x60] sm:$0xff]
    %v128 = vld [vmem:[#allocation5 + $0x68] sm:$0xff]
    %v129 = vld [vmem:[#allocation5 + $0x70] sm:$0xff]
    %v130 = vld [vmem:[#allocation5 + $0x78] sm:$0xff]
    %v131 = vld [vmem:[%s2] sm:$0x1]
    %v133 = vperm.slane %v131, 0
    %135 = vmatpush.msra.mxu0 %v130
    %136 = vmatpush.msra.mxu0 %v129
    %137 = vmatpush.msra.mxu0 %v128
    %138 = vmatpush.msra.mxu0 %v127
    %139 = vmatpush.msra.mxu0 %v126
    %140 = vmatpush.msra.mxu0 %v125
    %141 = vmatpush.msra.mxu0 %v124
    %142 = vmatpush.msra.mxu0 %v123
    %143 = vmatpush.msra.mxu0 %v122
    %144 = vmatpush.msra.mxu0 %v121
    %145 = vmatpush.msra.mxu0 %v120
    %146 = vmatpush.msra.mxu0 %v119
    %147 = vmatpush.msra.mxu0 %v118
    %148 = vmatpush.msra.mxu0 %v117
    %149 = vmatpush.msra.mxu0 %v116
    %150 = vmatpush.msra.mxu0 %v115
    %151 = vmatmul.f32.gmra.mxu0 %v114
    %v152 = vpop.f32.mrf.mxu0
    %v153 = vadd.f32 %v133, %v152
    %154 = vdwg.mxu0
    %v155 = vtanh.pop %v153
    %v156 = vld [vmem:[#allocation7] sm:$0xff]
    %v157 = vld [vmem:[#allocation7 + $0x8] sm:$0xff]
    %v158 = vld [vmem:[#allocation7 + $0x10] sm:$0xff]
    %v159 = vld [vmem:[#allocation7 + $0x18] sm:$0xff]
    %v160 = vld [vmem:[#allocation7 + $0x20] sm:$0xff]
    %v161 = vld [vmem:[#allocation7 + $0x28] sm:$0xff]
    %v162 = vld [vmem:[#allocation7 + $0x30] sm:$0xff]
    %v163 = vld [vmem:[#allocation7 + $0x38] sm:$0xff]
    %v164 = vld [vmem:[#allocation7 + $0x40] sm:$0xff]
    %v165 = vld [vmem:[#allocation7 + $0x48] sm:$0xff]
    %v166 = vld [vmem:[#allocation7 + $0x50] sm:$0xff]
    %v167 = vld [vmem:[#allocation7 + $0x58] sm:$0xff]
    %v168 = vld [vmem:[#allocation7 + $0x60] sm:$0xff]
    %v169 = vld [vmem:[#allocation7 + $0x68] sm:$0xff]
    %v170 = vld [vmem:[#allocation7 + $0x70] sm:$0xff]
    %v171 = vld [vmem:[#allocation7 + $0x78] sm:$0xff]
    %v172 = vld [vmem:[%s4] sm:$0x1]
    %v174 = vperm.slane %v172, 0
    %176 = vmatpush.msra.mxu0 %v171
    %177 = vmatpush.msra.mxu0 %v170
    %178 = vmatpush.msra.mxu0 %v169
    %179 = vmatpush.msra.mxu0 %v168
    %180 = vmatpush.msra.mxu0 %v167
    %181 = vmatpush.msra.mxu0 %v166
    %182 = vmatpush.msra.mxu0 %v165
    %183 = vmatpush.msra.mxu0 %v164
    %184 = vmatpush.msra.mxu0 %v163
    %185 = vmatpush.msra.mxu0 %v162
    %186 = vmatpush.msra.mxu0 %v161
    %187 = vmatpush.msra.mxu0 %v160
    %188 = vmatpush.msra.mxu0 %v159
    %189 = vmatpush.msra.mxu0 %v158
    %190 = vmatpush.msra.mxu0 %v157
    %191 = vmatpush.msra.mxu0 %v156
    %192 = vmatmul.f32.gmra.mxu0 %v155
    %v193 = vpop.f32.mrf.mxu0
    %v194 = vadd.f32 %v174, %v193
    %195 = vdwg.mxu0
    %196 = vst [vmem:[#allocation11] sm:$0xff] %v194
    %s197 = scalar_lea.vmem [#allocation2], 8
    %v198 = vld [vmem:[%s197] sm:$0xff]
    %v199 = vld [vmem:[#allocation8] sm:$0xff]
    %v200 = vld [vmem:[#allocation8 + $0x8] sm:$0xff]
    %v201 = vld [vmem:[#allocation8 + $0x10] sm:$0xff]
    %v202 = vld [vmem:[#allocation8 + $0x18] sm:$0xff]
    %v203 = vld [vmem:[#allocation8 + $0x20] sm:$0xff]
    %v204 = vld [vmem:[#allocation8 + $0x28] sm:$0xff]
    %v205 = vld [vmem:[#allocation8 + $0x30] sm:$0xff]
    %v206 = vld [vmem:[#allocation8 + $0x38] sm:$0xff]
    %v207 = vld [vmem:[#allocation8 + $0x40] sm:$0xff]
    %v208 = vld [vmem:[#allocation8 + $0x48] sm:$0xff]
    %v209 = vld [vmem:[#allocation8 + $0x50] sm:$0xff]
    %v210 = vld [vmem:[#allocation8 + $0x58] sm:$0xff]
    %v211 = vld [vmem:[#allocation8 + $0x60] sm:$0xff]
    %v212 = vld [vmem:[#allocation8 + $0x68] sm:$0xff]
    %v213 = vld [vmem:[#allocation8 + $0x70] sm:$0xff]
    %v214 = vld [vmem:[#allocation8 + $0x78] sm:$0xff]
    %v215 = vld [vmem:[%s6] sm:$0x1]
    %v217 = vperm.slane %v215, 0
    %219 = vmatpush.msra.mxu0 %v214
    %220 = vmatpush.msra.mxu0 %v213
    %221 = vmatpush.msra.mxu0 %v212
    %222 = vmatpush.msra.mxu0 %v211
    %223 = vmatpush.msra.mxu0 %v210
    %224 = vmatpush.msra.mxu0 %v209
    %225 = vmatpush.msra.mxu0 %v208
    %226 = vmatpush.msra.mxu0 %v207
    %227 = vmatpush.msra.mxu0 %v206
    %228 = vmatpush.msra.mxu0 %v205
    %229 = vmatpush.msra.mxu0 %v204
    %230 = vmatpush.msra.mxu0 %v203
    %231 = vmatpush.msra.mxu0 %v202
    %232 = vmatpush.msra.mxu0 %v201
    %233 = vmatpush.msra.mxu0 %v200
    %234 = vmatpush.msra.mxu0 %v199
    %235 = vmatmul.f32.gmra.mxu0 %v198
    %v236 = vpop.f32.mrf.mxu0
    %v237 = vadd.f32 %v217, %v236
    %238 = vdwg.mxu0
    %v239 = vtanh.pop %v237
    %v240 = vld [vmem:[#allocation10] sm:$0xff]
    %v241 = vld [vmem:[#allocation10 + $0x8] sm:$0xff]
    %v242 = vld [vmem:[#allocation10 + $0x10] sm:$0xff]
    %v243 = vld [vmem:[#allocation10 + $0x18] sm:$0xff]
    %v244 = vld [vmem:[#allocation10 + $0x20] sm:$0xff]
    %v245 = vld [vmem:[#allocation10 + $0x28] sm:$0xff]
    %v246 = vld [vmem:[#allocation10 + $0x30] sm:$0xff]
    %v247 = vld [vmem:[#allocation10 + $0x38] sm:$0xff]
    %v248 = vld [vmem:[#allocation10 + $0x40] sm:$0xff]
    %v249 = vld [vmem:[#allocation10 + $0x48] sm:$0xff]
    %v250 = vld [vmem:[#allocation10 + $0x50] sm:$0xff]
    %v251 = vld [vmem:[#allocation10 + $0x58] sm:$0xff]
    %v252 = vld [vmem:[#allocation10 + $0x60] sm:$0xff]
    %v253 = vld [vmem:[#allocation10 + $0x68] sm:$0xff]
    %v254 = vld [vmem:[#allocation10 + $0x70] sm:$0xff]
    %v255 = vld [vmem:[#allocation10 + $0x78] sm:$0xff]
    %v256 = vld [vmem:[%s8] sm:$0x1]
    %v258 = vperm.slane %v256, 0
    %260 = vmatpush.msra.mxu0 %v255
    %261 = vmatpush.msra.mxu0 %v254
    %262 = vmatpush.msra.mxu0 %v253
    %263 = vmatpush.msra.mxu0 %v252
    %264 = vmatpush.msra.mxu0 %v251
    %265 = vmatpush.msra.mxu0 %v250
    %266 = vmatpush.msra.mxu0 %v249
    %267 = vmatpush.msra.mxu0 %v248
    %268 = vmatpush.msra.mxu0 %v247
    %269 = vmatpush.msra.mxu0 %v246
    %270 = vmatpush.msra.mxu0 %v245
    %271 = vmatpush.msra.mxu0 %v244
    %272 = vmatpush.msra.mxu0 %v243
    %273 = vmatpush.msra.mxu0 %v242
    %274 = vmatpush.msra.mxu0 %v241
    %275 = vmatpush.msra.mxu0 %v240
    %276 = vmatmul.f32.gmra.mxu0 %v239
    %v277 = vpop.f32.mrf.mxu0
    %v278 = vadd.f32 %v258, %v277
    %279 = vdwg.mxu0
    %v280 = vmul.f32 %v278, 0.5
    %v281 = vtanh.pop %v280
    %v282 = vadd.f32 %v281, 1.0
    %v283 = vmul.f32 %v282, 0.5
    %284 = vst [vmem:[#allocation12] sm:$0xff] %v283
    // Predicated region
    $region58: #{tpu_custom_call.1} parent=1 // pred_check
      _
    $region59: #{tpu_custom_call.1} parent=1 // pred_check_branch
      %286 = sbr.rel (0) target = $region61
    $region60: #{tpu_custom_call.1} parent=1 // pred_region
      %288 = vsyncadd [#allocation4], 0
      %s290 = sshll.u32 [#allocation11], 4
      %s291 = int_to_ptr.vmem [resolvable:$true] %s290
      %s292 = sshll.u32 %s9, 4
      %s293 = int_to_ptr.hbm [resolvable:$true] %s292
      %295 = dma.vmem_to_hbm [thread:$0]  %s291, 128, %s293, [#allocation4]
    $region61: #{tpu_custom_call.1} parent=1 // pred_fallthru
      _
    // Predicated region
    $region62: #{tpu_custom_call.1} parent=1 // pred_check
      _
    $region63: #{tpu_custom_call.1} parent=1 // pred_check_branch
      %297 = sbr.rel (0) target = $region65
    $region64: #{tpu_custom_call.1} parent=1 // pred_region
      %299 = vsyncadd [#allocation13], 0
      %s301 = sshll.u32 [#allocation12], 4
      %s302 = int_to_ptr.vmem [resolvable:$true] %s301
      %s303 = sshll.u32 %s10, 4
      %s304 = int_to_ptr.hbm [resolvable:$true] %s303
      %306 = dma.vmem_to_hbm [thread:$0]  %s302, 128, %s304, [#allocation13]
    $region65: #{tpu_custom_call.1} parent=1 // pred_fallthru
      _
    // Predicated region
    $region66: #{tpu_custom_call.1} parent=1 // pred_check
      _
    $region67: #{tpu_custom_call.1} parent=1 // pred_check_branch
      %308 = sbr.rel (0) target = $region69
    $region68: #{tpu_custom_call.1} parent=1 // pred_region
      %310 = dma.done [#allocation4], 128
    $region69: #{tpu_custom_call.1} parent=1 // pred_fallthru
      _
    // Predicated region
    $region70: #{tpu_custom_call.1} parent=1 // pred_check
      _
    $region71: #{tpu_custom_call.1} parent=1 // pred_check_branch
      %312 = sbr.rel (0) target = $region73
    $region72: #{tpu_custom_call.1} parent=1 // pred_region
      %314 = dma.done [#allocation13], 128
    $region73: #{tpu_custom_call.1} parent=1 // pred_fallthru
      _
    %315 = vsyncpa [#allocation3], 1
    %316 = vsyncpa [#allocation6], 1
    %317 = vsyncpa [#allocation9], 1
    %318 = vsyncpa [#allocation4], 1
    %319 = vsyncpa [#allocation13], 1

// kernel: tpu_custom_call.1
$region0: #{tpu_custom_call.1}
  #allocation0 [shape = 'u32[]', space=smem, size = 0x4, offset = 0x4, fixed_abs, tag = 'smem constant byte address 0x4 - core index']
  #allocation1 [shape = 'u32[72,128]{1,0:T(1,128)}', space=vmem, size = 0x9000, scoped, tag = 'internal scratch']
  %s0 = inlined_call_operand.hbm [shape: f32[2,8,128], index: 0, kind: input, shape index: {}]
  %s1 = inlined_call_operand.hbm [shape: f32[128,128], index: 1, kind: input, shape index: {}]
  %s2 = inlined_call_operand.vmem [shape: f32[1,128], index: 2, kind: input, shape index: {}]
  %s3 = inlined_call_operand.hbm [shape: f32[128,128], index: 3, kind: input, shape index: {}]
  %s4 = inlined_call_operand.vmem [shape: f32[1,128], index: 4, kind: input, shape index: {}]
  %s5 = inlined_call_operand.hbm [shape: f32[128,128], index: 5, kind: input, shape index: {}]
  %s6 = inlined_call_operand.vmem [shape: f32[1,128], index: 6, kind: input, shape index: {}]
  %s7 = inlined_call_operand.hbm [shape: f32[128,128], index: 7, kind: input, shape index: {}]
  %s8 = inlined_call_operand.vmem [shape: f32[1,128], index: 8, kind: input, shape index: {}]
  %s9 = inlined_call_operand.hbm [shape: f32[8,128], index: 9, kind: output, shape index: {0}]
  %s10 = inlined_call_operand.hbm [shape: f32[8,128], index: 10, kind: output, shape index: {1}]
  %11 = xla_tuple %s9, %s10
  %s12 = sld [smem:[#allocation0]]
  $region74: #{tpu_custom_call.1} parent=0
    _
  %s14 = ssub.s32 1, %s12
  %s15 = scalar_select 0, %s14, %s12
  $region1: #{tpu_custom_call.1} parent=0
    #allocation2 [shape = 'u8[8192]{0}', space=vmem, size = 0x2000, scoped, tag = 'input window, operand 0, single buffered']
    #allocation3 [shape = 's32[1]{0}', space=sflag, size = 0x4, scoped, tag = 'scoped memory for tpu_custom_call.1']
    #allocation4 [shape = 's32[1]{0}', space=sflag, size = 0x4, scoped, tag = 'scoped memory for tpu_custom_call.1']
    #allocation5 [shape = 'u8[65536]{0}', space=vmem, size = 0x10000, scoped, tag = 'input window, operand 1, single buffered']
    #allocation6 [shape = 's32[1]{0}', space=sflag, size = 0x4, scoped, tag = 'scoped memory for tpu_custom_call.1']
    #allocation7 [shape = 'u8[65536]{0}', space=vmem, size = 0x10000, scoped, tag = 'input window, operand 3, single buffered']
    #allocation8 [shape = 'u8[65536]{0}', space=vmem, size = 0x10000, scoped, tag = 'input window, operand 5, single buffered']
    #allocation9 [shape = 's32[1]{0}', space=sflag, size = 0x4, scoped, tag = 'scoped memory for tpu_custom_call.1']
    #allocation10 [shape = 'u8[65536]{0}', space=vmem, size = 0x10000, scoped, tag = 'input window, operand 7, single buffered']
    #allocation11 [shape = 'u8[4096]{0}', space=vmem, size = 0x1000, scoped, tag = 'output window, operand 0, single buffered']
    #allocation12 [shape = 'u8[4096]{0}', space=vmem, size = 0x1000, scoped, tag = 'output window, operand 1, single buffered']
    #allocation13 [shape = 's32[1]{0}', space=sflag, size = 0x4, scoped, tag = 'scoped memory for tpu_custom_call.1']
    %16 = vsyncpa [#allocation3], 0
    %17 = vsyncpa [#allocation6], 0
    %18 = vsyncpa [#allocation9], 0
    %19 = vsyncpa [#allocation4], 0
    %20 = vsyncpa [#allocation13], 0
    // Predicated region
    $region2: #{tpu_custom_call.1} parent=1 // pred_check
      _
    $region3: #{tpu_custom_call.1} parent=1 // pred_check_branch
      %22 = sbr.rel (0) target = $region5
    $region4: #{tpu_custom_call.1} parent=1 // pred_region
      %24 = vsyncadd [#allocation3], 0
      %s25 = sshll.u32 %s0, 4
      %s26 = int_to_ptr.hbm [resolvable:$true] %s25
      %s27 = sshll.u32 [#allocation2], 4
      %s28 = int_to_ptr.vmem [resolvable:$true] %s27
      %33 = dma.hbm_to_vmem [thread:$0]  %s26, 256, %s28, [#allocation3], 128, 128, 8
    $region5: #{tpu_custom_call.1} parent=1 // pred_fallthru
      _
    // Predicated region
    $region6: #{tpu_custom_call.1} parent=1 // pred_check
      _
    $region7: #{tpu_custom_call.1} parent=1 // pred_check_branch
      %35 = sbr.rel (0) target = $region9
    $region8: #{tpu_custom_call.1} parent=1 // pred_region
      %37 = vsyncadd [#allocation6], 0
      %s38 = sshll.u32 %s1, 4
      %s39 = int_to_ptr.hbm [resolvable:$true] %s38
      %s40 = sshll.u32 [#allocation5], 4
      %s41 = int_to_ptr.vmem [resolvable:$true] %s40
      %46 = dma.hbm_to_vmem [thread:$0]  %s39, 2048, %s41, [#allocation6], 128, 128, 8
    $region9: #{tpu_custom_call.1} parent=1 // pred_fallthru
      _
    // Predicated region
    $region10: #{tpu_custom_call.1} parent=1 // pred_check
      _
    $region11: #{tpu_custom_call.1} parent=1 // pred_check_branch
      %48 = sbr.rel (0) target = $region13
    $region12: #{tpu_custom_call.1} parent=1 // pred_region
      _
    $region13: #{tpu_custom_call.1} parent=1 // pred_fallthru
      _
    // Predicated region
    $region14: #{tpu_custom_call.1} parent=1 // pred_check
      _
    $region15: #{tpu_custom_call.1} parent=1 // pred_check_branch
      %50 = sbr.rel (0) target = $region17
    $region16: #{tpu_custom_call.1} parent=1 // pred_region
      %52 = vsyncadd [#allocation6], 0
      %s53 = sshll.u32 %s3, 4
      %s54 = int_to_ptr.hbm [resolvable:$true] %s53
      %s55 = sshll.u32 [#allocation7], 4
      %s56 = int_to_ptr.vmem [resolvable:$true] %s55
      %61 = dma.hbm_to_vmem [thread:$0]  %s54, 2048, %s56, [#allocation6], 128, 128, 8
    $region17: #{tpu_custom_call.1} parent=1 // pred_fallthru
      _
    // Predicated region
    $region18: #{tpu_custom_call.1} parent=1 // pred_check
      _
    $region19: #{tpu_custom_call.1} parent=1 // pred_check_branch
      %63 = sbr.rel (0) target = $region21
    $region20: #{tpu_custom_call.1} parent=1 // pred_region
      _
    $region21: #{tpu_custom_call.1} parent=1 // pred_fallthru
      _
    // Predicated region
    $region22: #{tpu_custom_call.1} parent=1 // pred_check
      _
    $region23: #{tpu_custom_call.1} parent=1 // pred_check_branch
      %65 = sbr.rel (0) target = $region25
    $region24: #{tpu_custom_call.1} parent=1 // pred_region
      %67 = vsyncadd [#allocation9], 0
      %s68 = sshll.u32 %s5, 4
      %s69 = int_to_ptr.hbm [resolvable:$true] %s68
      %s70 = sshll.u32 [#allocation8], 4
      %s71 = int_to_ptr.vmem [resolvable:$true] %s70
      %76 = dma.hbm_to_vmem [thread:$0]  %s69, 2048, %s71, [#allocation9], 128, 128, 8
    $region25: #{tpu_custom_call.1} parent=1 // pred_fallthru
      _
    // Predicated region
    $region26: #{tpu_custom_call.1} parent=1 // pred_check
      _
    $region27: #{tpu_custom_call.1} parent=1 // pred_check_branch
      %78 = sbr.rel (0) target = $region29
    $region28: #{tpu_custom_call.1} parent=1 // pred_region
      _
    $region29: #{tpu_custom_call.1} parent=1 // pred_fallthru
      _
    // Predicated region
    $region30: #{tpu_custom_call.1} parent=1 // pred_check
      _
    $region31: #{tpu_custom_call.1} parent=1 // pred_check_branch
      %80 = sbr.rel (0) target = $region33
    $region32: #{tpu_custom_call.1} parent=1 // pred_region
      %82 = vsyncadd [#allocation9], 0
      %s83 = sshll.u32 %s7, 4
      %s84 = int_to_ptr.hbm [resolvable:$true] %s83
      %s85 = sshll.u32 [#allocation10], 4
      %s86 = int_to_ptr.vmem [resolvable:$true] %s85
      %91 = dma.hbm_to_vmem [thread:$0]  %s84, 2048, %s86, [#allocation9], 128, 128, 8
    $region33: #{tpu_custom_call.1} parent=1 // pred_fallthru
      _
    // Predicated region
    $region34: #{tpu_custom_call.1} parent=1 // pred_check
      _
    $region35: #{tpu_custom_call.1} parent=1 // pred_check_branch
      %93 = sbr.rel (0) target = $region37
    $region36: #{tpu_custom_call.1} parent=1 // pred_region
      _
    $region37: #{tpu_custom_call.1} parent=1 // pred_fallthru
      _
    // Predicated region
    $region38: #{tpu_custom_call.1} parent=1 // pred_check
      _
    $region39: #{tpu_custom_call.1} parent=1 // pred_check_branch
      %95 = sbr.rel (0) target = $region41
    $region40: #{tpu_custom_call.1} parent=1 // pred_region
      %97 = dma.done [#allocation3], 256
    $region41: #{tpu_custom_call.1} parent=1 // pred_fallthru
      _
    // Predicated region
    $region42: #{tpu_custom_call.1} parent=1 // pred_check
      _
    $region43: #{tpu_custom_call.1} parent=1 // pred_check_branch
      %99 = sbr.rel (0) target = $region45
    $region44: #{tpu_custom_call.1} parent=1 // pred_region
      %101 = dma.done [#allocation6], 2048
    $region45: #{tpu_custom_call.1} parent=1 // pred_fallthru
      _
    // Predicated region
    $region46: #{tpu_custom_call.1} parent=1 // pred_check
      _
    $region47: #{tpu_custom_call.1} parent=1 // pred_check_branch
      %103 = sbr.rel (0) target = $region49
    $region48: #{tpu_custom_call.1} parent=1 // pred_region
      %105 = dma.done [#allocation6], 2048
    $region49: #{tpu_custom_call.1} parent=1 // pred_fallthru
      _
    // Predicated region
    $region50: #{tpu_custom_call.1} parent=1 // pred_check
      _
    $region51: #{tpu_custom_call.1} parent=1 // pred_check_branch
      %107 = sbr.rel (0) target = $region53
    $region52: #{tpu_custom_call.1} parent=1 // pred_region
      %109 = dma.done [#allocation9], 2048
    $region53: #{tpu_custom_call.1} parent=1 // pred_fallthru
      _
    // Predicated region
    $region54: #{tpu_custom_call.1} parent=1 // pred_check
      _
    $region55: #{tpu_custom_call.1} parent=1 // pred_check_branch
      %111 = sbr.rel (0) target = $region57
    $region56: #{tpu_custom_call.1} parent=1 // pred_region
      %113 = dma.done [#allocation9], 2048
    $region57: #{tpu_custom_call.1} parent=1 // pred_fallthru
      _
    %v114 = vld [vmem:[#allocation2] sm:$0xff]
    %v115 = vld [vmem:[#allocation5] sm:$0xff]
    %v116 = vld [vmem:[#allocation5 + $0x8] sm:$0xff]
    %v117 = vld [vmem:[#allocation5 + $0x10] sm:$0xff]
    %v118 = vld [vmem:[#allocation5 + $0x18] sm:$0xff]
    %v119 = vld [vmem:[#allocation5 + $0x20] sm:$0xff]
    %v120 = vld [vmem:[#allocation5 + $0x28] sm:$0xff]
    %v121 = vld [vmem:[#allocation5 + $0x30] sm:$0xff]
    %v122 = vld [vmem:[#allocation5 + $0x38] sm:$0xff]
    %v123 = vld [vmem:[#allocation5 + $0x40] sm:$0xff]
    %v124 = vld [vmem:[#allocation5 + $0x48] sm:$0xff]
    %v125 = vld [vmem:[#allocation5 + $0x50] sm:$0xff]
    %v126 = vld [vmem:[#allocation5 + $0x58] sm:$0xff]
    %v127 = vld [vmem:[#allocation5 + $0x60] sm:$0xff]
    %v128 = vld [vmem:[#allocation5 + $0x68] sm:$0xff]
    %v129 = vld [vmem:[#allocation5 + $0x70] sm:$0xff]
    %v130 = vld [vmem:[#allocation5 + $0x78] sm:$0xff]
    %v131 = vld [vmem:[%s2] sm:$0x1]
    %v133 = vperm.slane %v131, 0
    %135 = vmatpush.msra.mxu0 %v130
    %136 = vmatpush.msra.mxu0 %v129
    %137 = vmatpush.msra.mxu0 %v128
    %138 = vmatpush.msra.mxu0 %v127
    %139 = vmatpush.msra.mxu0 %v126
    %140 = vmatpush.msra.mxu0 %v125
    %141 = vmatpush.msra.mxu0 %v124
    %142 = vmatpush.msra.mxu0 %v123
    %143 = vmatpush.msra.mxu0 %v122
    %144 = vmatpush.msra.mxu0 %v121
    %145 = vmatpush.msra.mxu0 %v120
    %146 = vmatpush.msra.mxu0 %v119
    %147 = vmatpush.msra.mxu0 %v118
    %148 = vmatpush.msra.mxu0 %v117
    %149 = vmatpush.msra.mxu0 %v116
    %150 = vmatpush.msra.mxu0 %v115
    %151 = vmatmul.f32.gmra.mxu0 %v114
    %v152 = vpop.f32.mrf.mxu0
    %v153 = vadd.f32 %v133, %v152
    %154 = vdwg.mxu0
    %v155 = vtanh.pop %v153
    %v156 = vld [vmem:[#allocation7] sm:$0xff]
    %v157 = vld [vmem:[#allocation7 + $0x8] sm:$0xff]
    %v158 = vld [vmem:[#allocation7 + $0x10] sm:$0xff]
    %v159 = vld [vmem:[#allocation7 + $0x18] sm:$0xff]
    %v160 = vld [vmem:[#allocation7 + $0x20] sm:$0xff]
    %v161 = vld [vmem:[#allocation7 + $0x28] sm:$0xff]
    %v162 = vld [vmem:[#allocation7 + $0x30] sm:$0xff]
    %v163 = vld [vmem:[#allocation7 + $0x38] sm:$0xff]
    %v164 = vld [vmem:[#allocation7 + $0x40] sm:$0xff]
    %v165 = vld [vmem:[#allocation7 + $0x48] sm:$0xff]
    %v166 = vld [vmem:[#allocation7 + $0x50] sm:$0xff]
    %v167 = vld [vmem:[#allocation7 + $0x58] sm:$0xff]
    %v168 = vld [vmem:[#allocation7 + $0x60] sm:$0xff]
    %v169 = vld [vmem:[#allocation7 + $0x68] sm:$0xff]
    %v170 = vld [vmem:[#allocation7 + $0x70] sm:$0xff]
    %v171 = vld [vmem:[#allocation7 + $0x78] sm:$0xff]
    %v172 = vld [vmem:[%s4] sm:$0x1]
    %v174 = vperm.slane %v172, 0
    %176 = vmatpush.msra.mxu0 %v171
    %177 = vmatpush.msra.mxu0 %v170
    %178 = vmatpush.msra.mxu0 %v169
    %179 = vmatpush.msra.mxu0 %v168
    %180 = vmatpush.msra.mxu0 %v167
    %181 = vmatpush.msra.mxu0 %v166
    %182 = vmatpush.msra.mxu0 %v165
    %183 = vmatpush.msra.mxu0 %v164
    %184 = vmatpush.msra.mxu0 %v163
    %185 = vmatpush.msra.mxu0 %v162
    %186 = vmatpush.msra.mxu0 %v161
    %187 = vmatpush.msra.mxu0 %v160
    %188 = vmatpush.msra.mxu0 %v159
    %189 = vmatpush.msra.mxu0 %v158
    %190 = vmatpush.msra.mxu0 %v157
    %191 = vmatpush.msra.mxu0 %v156
    %192 = vmatmul.f32.gmra.mxu0 %v155
    %v193 = vpop.f32.mrf.mxu0
    %v194 = vadd.f32 %v174, %v193
    %195 = vdwg.mxu0
    %196 = vst [vmem:[#allocation11] sm:$0xff] %v194
    %s197 = scalar_lea.vmem [#allocation2], 8
    %v198 = vld [vmem:[%s197] sm:$0xff]
    %v199 = vld [vmem:[#allocation8] sm:$0xff]
    %v200 = vld [vmem:[#allocation8 + $0x8] sm:$0xff]
    %v201 = vld [vmem:[#allocation8 + $0x10] sm:$0xff]
    %v202 = vld [vmem:[#allocation8 + $0x18] sm:$0xff]
    %v203 = vld [vmem:[#allocation8 + $0x20] sm:$0xff]
    %v204 = vld [vmem:[#allocation8 + $0x28] sm:$0xff]
    %v205 = vld [vmem:[#allocation8 + $0x30] sm:$0xff]
    %v206 = vld [vmem:[#allocation8 + $0x38] sm:$0xff]
    %v207 = vld [vmem:[#allocation8 + $0x40] sm:$0xff]
    %v208 = vld [vmem:[#allocation8 + $0x48] sm:$0xff]
    %v209 = vld [vmem:[#allocation8 + $0x50] sm:$0xff]
    %v210 = vld [vmem:[#allocation8 + $0x58] sm:$0xff]
    %v211 = vld [vmem:[#allocation8 + $0x60] sm:$0xff]
    %v212 = vld [vmem:[#allocation8 + $0x68] sm:$0xff]
    %v213 = vld [vmem:[#allocation8 + $0x70] sm:$0xff]
    %v214 = vld [vmem:[#allocation8 + $0x78] sm:$0xff]
    %v215 = vld [vmem:[%s6] sm:$0x1]
    %v217 = vperm.slane %v215, 0
    %219 = vmatpush.msra.mxu0 %v214
    %220 = vmatpush.msra.mxu0 %v213
    %221 = vmatpush.msra.mxu0 %v212
    %222 = vmatpush.msra.mxu0 %v211
    %223 = vmatpush.msra.mxu0 %v210
    %224 = vmatpush.msra.mxu0 %v209
    %225 = vmatpush.msra.mxu0 %v208
    %226 = vmatpush.msra.mxu0 %v207
    %227 = vmatpush.msra.mxu0 %v206
    %228 = vmatpush.msra.mxu0 %v205
    %229 = vmatpush.msra.mxu0 %v204
    %230 = vmatpush.msra.mxu0 %v203
    %231 = vmatpush.msra.mxu0 %v202
    %232 = vmatpush.msra.mxu0 %v201
    %233 = vmatpush.msra.mxu0 %v200
    %234 = vmatpush.msra.mxu0 %v199
    %235 = vmatmul.f32.gmra.mxu0 %v198
    %v236 = vpop.f32.mrf.mxu0
    %v237 = vadd.f32 %v217, %v236
    %238 = vdwg.mxu0
    %v239 = vtanh.pop %v237
    %v240 = vld [vmem:[#allocation10] sm:$0xff]
    %v241 = vld [vmem:[#allocation10 + $0x8] sm:$0xff]
    %v242 = vld [vmem:[#allocation10 + $0x10] sm:$0xff]
    %v243 = vld [vmem:[#allocation10 + $0x18] sm:$0xff]
    %v244 = vld [vmem:[#allocation10 + $0x20] sm:$0xff]
    %v245 = vld [vmem:[#allocation10 + $0x28] sm:$0xff]
    %v246 = vld [vmem:[#allocation10 + $0x30] sm:$0xff]
    %v247 = vld [vmem:[#allocation10 + $0x38] sm:$0xff]
    %v248 = vld [vmem:[#allocation10 + $0x40] sm:$0xff]
    %v249 = vld [vmem:[#allocation10 + $0x48] sm:$0xff]
    %v250 = vld [vmem:[#allocation10 + $0x50] sm:$0xff]
    %v251 = vld [vmem:[#allocation10 + $0x58] sm:$0xff]
    %v252 = vld [vmem:[#allocation10 + $0x60] sm:$0xff]
    %v253 = vld [vmem:[#allocation10 + $0x68] sm:$0xff]
    %v254 = vld [vmem:[#allocation10 + $0x70] sm:$0xff]
    %v255 = vld [vmem:[#allocation10 + $0x78] sm:$0xff]
    %v256 = vld [vmem:[%s8] sm:$0x1]
    %v258 = vperm.slane %v256, 0
    %260 = vmatpush.msra.mxu0 %v255
    %261 = vmatpush.msra.mxu0 %v254
    %262 = vmatpush.msra.mxu0 %v253
    %263 = vmatpush.msra.mxu0 %v252
    %264 = vmatpush.msra.mxu0 %v251
    %265 = vmatpush.msra.mxu0 %v250
    %266 = vmatpush.msra.mxu0 %v249
    %267 = vmatpush.msra.mxu0 %v248
    %268 = vmatpush.msra.mxu0 %v247
    %269 = vmatpush.msra.mxu0 %v246
    %270 = vmatpush.msra.mxu0 %v245
    %271 = vmatpush.msra.mxu0 %v244
    %272 = vmatpush.msra.mxu0 %v243
    %273 = vmatpush.msra.mxu0 %v242
    %274 = vmatpush.msra.mxu0 %v241
    %275 = vmatpush.msra.mxu0 %v240
    %276 = vmatmul.f32.gmra.mxu0 %v239
    %v277 = vpop.f32.mrf.mxu0
    %v278 = vadd.f32 %v258, %v277
    %279 = vdwg.mxu0
    %v280 = vmul.f32 %v278, 0.5
    %v281 = vtanh.pop %v280
    %v282 = vadd.f32 %v281, 1.0
    %v283 = vmul.f32 %v282, 0.5
    %284 = vst [vmem:[#allocation12] sm:$0xff] %v283
    // Predicated region
    $region58: #{tpu_custom_call.1} parent=1 // pred_check
      _
    $region59: #{tpu_custom_call.1} parent=1 // pred_check_branch
      %286 = sbr.rel (0) target = $region61
    $region60: #{tpu_custom_call.1} parent=1 // pred_region
      %288 = vsyncadd [#allocation4], 0
      %s290 = sshll.u32 [#allocation11], 4
      %s291 = int_to_ptr.vmem [resolvable:$true] %s290
      %s292 = sshll.u32 %s9, 4
      %s293 = int_to_ptr.hbm [resolvable:$true] %s292
      %295 = dma.vmem_to_hbm [thread:$0]  %s291, 128, %s293, [#allocation4]
    $region61: #{tpu_custom_call.1} parent=1 // pred_fallthru
      _
    // Predicated region
    $region62: #{tpu_custom_call.1} parent=1 // pred_check
      _
    $region63: #{tpu_custom_call.1} parent=1 // pred_check_branch
      %297 = sbr.rel (0) target = $region65
    $region64: #{tpu_custom_call.1} parent=1 // pred_region
      %299 = vsyncadd [#allocation13], 0
      %s301 = sshll.u32 [#allocation12], 4
      %s302 = int_to_ptr.vmem [resolvable:$true] %s301
      %s303 = sshll.u32 %s10, 4
      %s304 = int_to_ptr.hbm [resolvable:$true] %s303
      %306 = dma.vmem_to_hbm [thread:$0]  %s302, 128, %s304, [#allocation13]
    $region65: #{tpu_custom_call.1} parent=1 // pred_fallthru
      _
    // Predicated region
    $region66: #{tpu_custom_call.1} parent=1 // pred_check
      _
    $region67: #{tpu_custom_call.1} parent=1 // pred_check_branch
      %308 = sbr.rel (0) target = $region69
    $region68: #{tpu_custom_call.1} parent=1 // pred_region
      %310 = dma.done [#allocation4], 128
    $region69: #{tpu_custom_call.1} parent=1 // pred_fallthru
      _
    // Predicated region
    $region70: #{tpu_custom_call.1} parent=1 // pred_check
      _
    $region71: #{tpu_custom_call.1} parent=1 // pred_check_branch
      %312 = sbr.rel (0) target = $region73
    $region72: #{tpu_custom_call.1} parent=1 // pred_region
      %314 = dma.done [#allocation13], 128
    $region73: #{tpu_custom_call.1} parent=1 // pred_fallthru
      _
    %315 = vsyncpa [#allocation3], 1
    %316 = vsyncpa [#allocation6], 1
    %317 = vsyncpa [#allocation9], 1
    %318 = vsyncpa [#allocation4], 1
    %319 = vsyncpa [#allocation13], 1

</llo_original>
